<compile_context>
chip_gen: v7x
topology: tpu7x:2x2x1
jax: 0.10.0
libtpu: 0.0.40
codegen_flags: <defaults>
</compile_context>

<pallas_src>
import functools

import jax
import jax.numpy as jnp
from jax.experimental import pallas as pl
from jax.experimental.pallas import tpu as pltpu

LANE = 128
SUBLANE = 8
ENC_CHUNK = 64                    # encoder time-chunk per grid step
SS_COL_TILE = 2048                # SS mask-head column tile (~1 MB f32 / buffer)
VMEM_LIMIT = 64 * 1024 * 1024


# ----------------------------------------------------------------------------
# Padding helpers (exact: pads are zeros and stay zero through the LSTM math).
# ----------------------------------------------------------------------------
def _round_up(n, m):
    return ((n + m - 1) // m) * m


def _pad_to(x, axis, target):
    pad = target - x.shape[axis]
    if pad == 0:
        return x
    widths = [(0, 0)] * x.ndim
    widths[axis] = (0, pad)
    return jnp.pad(x, widths)


def _pad_gate_dim(w, H, Hp):
    """Pad each of the 4 gate blocks [i|f|g|o] of the last dim from H to Hp."""
    lead = w.shape[:-1]
    w4 = w.reshape(lead + (4, H))
    w4 = _pad_to(w4, -1, Hp)
    return w4.reshape(lead + (4 * Hp,))


def _ss_tiles(sf):
    """(col_tile, padded_cols) for the SS head; col_tile always divides cols."""
    ct = min(SS_COL_TILE, _round_up(sf, LANE))
    return ct, _round_up(sf, ct)


# ----------------------------------------------------------------------------
# Generic linear kernel (used once, to fold the decoder embedding into a
# per-vocab gate table: emb_table @ W_ih + b).
# ----------------------------------------------------------------------------
def _linear_kernel(x_ref, w_ref, b_ref, o_ref):
    o_ref[...] = (
        jnp.dot(x_ref[...], w_ref[...], preferred_element_type=jnp.float32)
        + b_ref[...])


def run_linear(x, w, b, row_tile=256):
    M, K = x.shape
    N = w.shape[1]
    # Never a single oversized block: pad rows up to the tile instead.
    Mp = _round_up(M, SUBLANE)
    rt = min(row_tile, Mp)
    Mp = _round_up(Mp, rt)
    x_p = _pad_to(x, 0, Mp)
    out = pl.pallas_call(
        _linear_kernel,
        grid=(Mp // rt,),
        in_specs=[
            pl.BlockSpec((rt, K), lambda i: (i, 0)),
            pl.BlockSpec((K, N), lambda i: (0, 0)),
            pl.BlockSpec((1, N), lambda i: (0, 0)),
        ],
        out_specs=pl.BlockSpec((rt, N), lambda i: (i, 0)),
        out_shape=jax.ShapeDtypeStruct((Mp, N), jnp.float32),
        compiler_params=pltpu.CompilerParams(
            dimension_semantics=("parallel",)),
    )(x_p, w, b)
    return out[:M]


# ----------------------------------------------------------------------------
# Encoder: time-chunked LSTM recurrence with a fused per-chunk input
# projection.  h/c live in VMEM scratch and persist across grid steps.
# ----------------------------------------------------------------------------
def _lstm_encoder_kernel(src_ref, wih_ref, b_ref, whh_ref, len_ref,
                         ctx_ref, hN_ref, cN_ref,
                         h_sc, c_sc, gx_sc, *, chunk):
    ci = pl.program_id(0)
    Bp, Hp = h_sc.shape
    Fdim = src_ref.shape[2]

    @pl.when(ci == 0)
    def _():
        h_sc[...] = jnp.zeros_like(h_sc)
        c_sc[...] = jnp.zeros_like(c_sc)

    # Fused, hoisted input projection for this whole chunk: one big MXU matmul
    # (no HBM round-trip of the 4Hp-wide gate tensor).
    x = src_ref[...].reshape(chunk * Bp, Fdim)
    gx_sc[...] = (
        jnp.dot(x, wih_ref[...], preferred_element_type=jnp.float32)
        + b_ref[...]).reshape(chunk, Bp, 4 * Hp)

    whh = whh_ref[...]
    lens = len_ref[...]                                # (Bp, 1) int32

    @pl.loop(0, chunk)
    def _(t):
        h = h_sc[...]
        c = c_sc[...]
        gates = gx_sc[t] + jnp.dot(h, whh, preferred_element_type=jnp.float32)
        i_g = jax.nn.sigmoid(gates[:, 0 * Hp:1 * Hp])
        f_g = jax.nn.sigmoid(gates[:, 1 * Hp:2 * Hp])
        g_g = jnp.tanh(gates[:, 2 * Hp:3 * Hp])
        o_g = jax.nn.sigmoid(gates[:, 3 * Hp:4 * Hp])
        c_new = f_g * c + i_g * g_g
        h_new = o_g * jnp.tanh(c_new)
        # Per-sample length gating == pack_padded_sequence: frames at or past
        # a sample's length neither update the state nor emit a context.
        valid = lens > (ci * chunk + t)                # (Bp, 1) bool
        h_sc[...] = jnp.where(valid, h_new, h)
        c_sc[...] = jnp.where(valid, c_new, c)
        ctx_ref[t] = jnp.where(valid, h_new, jnp.zeros_like(h_new))

    @pl.when(ci == pl.num_programs(0) - 1)
    def _():
        hN_ref[...] = h_sc[...]                        # written once at the end
        cN_ref[...] = c_sc[...]


def run_encoder(src_p, lens_p, wih, bias, whh, *, chunk):
    Sp, Bp, Fdim = src_p.shape
    Hp = whh.shape[0]
    G4 = 4 * Hp
    kernel = functools.partial(_lstm_encoder_kernel, chunk=chunk)
    return pl.pallas_call(
        kernel,
        grid=(Sp // chunk,),
        in_specs=[
            pl.BlockSpec((chunk, Bp, Fdim), lambda i: (i, 0, 0)),
            pl.BlockSpec((Fdim, G4), lambda i: (0, 0)),
            pl.BlockSpec((1, G4), lambda i: (0, 0)),
            pl.BlockSpec((Hp, G4), lambda i: (0, 0)),
            pl.BlockSpec((Bp, 1), lambda i: (0, 0)),
        ],
        out_specs=(
            pl.BlockSpec((chunk, Bp, Hp), lambda i: (i, 0, 0)),
            pl.BlockSpec((Bp, Hp), lambda i: (0, 0)),
            pl.BlockSpec((Bp, Hp), lambda i: (0, 0)),
        ),
        out_shape=(
            jax.ShapeDtypeStruct((Sp, Bp, Hp), jnp.float32),
            jax.ShapeDtypeStruct((Bp, Hp), jnp.float32),
            jax.ShapeDtypeStruct((Bp, Hp), jnp.float32),
        ),
        scratch_shapes=[
            pltpu.VMEM((Bp, Hp), jnp.float32),          # h carry
            pltpu.VMEM((Bp, Hp), jnp.float32),          # c carry
            pltpu.VMEM((chunk, Bp, G4), jnp.float32),   # per-chunk input gates
        ],
        compiler_params=pltpu.CompilerParams(
            dimension_semantics=("arbitrary",),
            vmem_limit_bytes=VMEM_LIMIT),
    )(src_p, wih, bias, whh, lens_p)


# ----------------------------------------------------------------------------
# Decoder: LSTM step + length-masked dot-product attention over the encoder
# contexts (already in (B, S, H) consumer layout — single VMEM copy, no
# in-kernel transpose).  Short time loop is fully unrolled.
# ----------------------------------------------------------------------------
def _lstm_attn_decoder_kernel(gx_ref, ctx_ref, mask_ref, whh_ref, wc_ref,
                              h0_ref, c0_ref, out_ref):
    T = gx_ref.shape[0]
    Hp = h0_ref.shape[1]
    whh = whh_ref[...]
    wc = wc_ref[...]
    ctx = ctx_ref[...]                     # (Bp, Sp, Hp), one resident copy
    amask = mask_ref[...][:, None, :]      # (Bp, 1, Sp) additive length mask

    def step(t, carry):
        h, c = carry
        gates = gx_ref[t] + jnp.dot(h, whh, preferred_element_type=jnp.float32)
        i_g = jax.nn.sigmoid(gates[:, 0 * Hp:1 * Hp])
        f_g = jax.nn.sigmoid(gates[:, 1 * Hp:2 * Hp])
        g_g = jnp.tanh(gates[:, 2 * Hp:3 * Hp])
        o_g = jax.nn.sigmoid(gates[:, 3 * Hp:4 * Hp])
        c_new = f_g * c + i_g * g_g
        h_new = o_g * jnp.tanh(c_new)

        # Dot-product attention over contexts (MXU batched einsums), masked so
        # frames beyond each sample's length receive zero weight.
        scores = jnp.einsum('bqh,bsh->bqs', h_new[:, None, :], ctx,
                            preferred_element_type=jnp.float32) + amask
        attn = jax.nn.softmax(scores, axis=-1)
        ctx_vec = jnp.einsum('bqs,bsh->bqh', attn, ctx,
                             preferred_element_type=jnp.float32)[:, 0, :]

        # Output projection tanh(Wc [h; ctx]) as one K=2*Hp matmul (both halves
        # are 128-lane aligned, so the concat is a cheap vreg copy and the
        # contraction fills the 256-deep MXU on v6e/v7x).
        hc = jnp.concatenate([h_new, ctx_vec], axis=-1)
        out_ref[t] = jnp.tanh(
            jnp.dot(hc, wc, preferred_element_type=jnp.float32))
        return (h_new, c_new)

    # Short serial loop (≈ number of speakers): fully unrolled so the LLO
    # scheduler can overlap the next step's W_hh push with this step's
    # attention / EUP work.
    jax.lax.fori_loop(0, T, step, (h0_ref[...], c0_ref[...]), unroll=True)


def run_decoder(gx, ctx, amask, whh, wc, h0, c0):
    T, Bp, G4 = gx.shape
    _, Sp, Hp = ctx.shape
    return pl.pallas_call(
        _lstm_attn_decoder_kernel,
        grid=(1,),
        in_specs=[
            pl.BlockSpec((T, Bp, G4), lambda i: (0, 0, 0)),
            pl.BlockSpec((Bp, Sp, Hp), lambda i: (0, 0, 0)),
            pl.BlockSpec((Bp, Sp), lambda i: (0, 0)),
            pl.BlockSpec((Hp, G4), lambda i: (0, 0)),
            pl.BlockSpec((2 * Hp, Hp), lambda i: (0, 0)),
            pl.BlockSpec((Bp, Hp), lambda i: (0, 0)),
            pl.BlockSpec((Bp, Hp), lambda i: (0, 0)),
        ],
        out_specs=pl.BlockSpec((T, Bp, Hp), lambda i: (0, 0, 0)),
        out_shape=jax.ShapeDtypeStruct((T, Bp, Hp), jnp.float32),
        compiler_params=pltpu.CompilerParams(
            dimension_semantics=("arbitrary",),
            vmem_limit_bytes=VMEM_LIMIT),
    )(gx, ctx, amask, whh, wc, h0, c0)
    # TODO(synk): for very long contexts on v7x (64 MiB VMEM), stream ctx over
    # S (pl.ANY + double-buffered make_async_copy) with online-softmax
    # accumulation instead of a fully resident block.


# ----------------------------------------------------------------------------
# SS mask head: sigmoid((N, Hp) @ (Hp, S*F) + b), column-tiled so ss_w streams
# through VMEM in lane-dense blocks (never a single full-width block).
# ----------------------------------------------------------------------------
def _ss_kernel(x_ref, w_ref, b_ref, o_ref):
    o_ref[...] = jax.nn.sigmoid(
        jnp.dot(x_ref[...], w_ref[...], preferred_element_type=jnp.float32)
        + b_ref[...])


def run_ss(x_flat, w, b):
    N, Hp = x_flat.shape
    SFp = w.shape[1]
    ct, _ = _ss_tiles(SFp)                  # ct always divides SFp (pre-padded)
    return pl.pallas_call(
        _ss_kernel,
        grid=(SFp // ct,),
        in_specs=[
            pl.BlockSpec((N, Hp), lambda j: (0, 0)),
            pl.BlockSpec((Hp, ct), lambda j: (0, j)),
            pl.BlockSpec((1, ct), lambda j: (0, j)),
        ],
        out_specs=pl.BlockSpec((N, ct), lambda j: (0, j)),
        out_shape=jax.ShapeDtypeStruct((N, SFp), jnp.float32),
        compiler_params=pltpu.CompilerParams(
            dimension_semantics=("parallel",)),
    )(x_flat, w, b)
    # TODO(synk): optionally stream ss_w as bf16 (f32 accumulation) to halve
    # HBM traffic on this bandwidth-bound head.


# ----------------------------------------------------------------------------
# Parameters: logical (PyTorch-shaped) init + one-time preparation
# (lane padding, Wc packing, embedding + W_ih fold, SS column padding).
# ----------------------------------------------------------------------------
def init_params(key, F, H, E, V, S):
    ks = jax.random.split(key, 10)
    s = 0.1
    # Note: PyTorch nn.LSTM has two biases (b_ih, b_hh); a checkpoint would be
    # loaded with b = b_ih + b_hh (mathematically equivalent).
    return dict(
        enc_wih=s * jax.random.normal(ks[0], (F, 4 * H), jnp.float32),
        enc_whh=s * jax.random.normal(ks[1], (H, 4 * H), jnp.float32),
        enc_b=s * jax.random.normal(ks[2], (1, 4 * H), jnp.float32),
        emb_table=s * jax.random.normal(ks[3], (V, E), jnp.float32),
        dec_wih=s * jax.random.normal(ks[4], (E, 4 * H), jnp.float32),
        dec_whh=s * jax.random.normal(ks[5], (H, 4 * H), jnp.float32),
        dec_b=s * jax.random.normal(ks[6], (1, 4 * H), jnp.float32),
        dec_wc=s * jax.random.normal(ks[7], (2 * H, H), jnp.float32),
        ss_w=s * jax.random.normal(ks[8], (H, S * F), jnp.float32),
        ss_b=s * jax.random.normal(ks[9], (1, S * F), jnp.float32),
    )


def prepare_params(p, H):
    """One-time weight prep: pad hidden dim to 128 lanes (zeros, exact), pack
    Wc for a single K=2Hp matmul, fold embedding + W_ih into a gate table,
    pad the SS head columns to a multiple of its column tile."""
    Hp = _round_up(H, LANE)

    enc_wih = _pad_gate_dim(p["enc_wih"], H, Hp)                      # (F, 4Hp)
    enc_whh = _pad_gate_dim(_pad_to(p["enc_whh"], 0, Hp), H, Hp)      # (Hp, 4Hp)
    enc_b = _pad_gate_dim(p["enc_b"], H, Hp)                          # (1, 4Hp)

    dec_wih = _pad_gate_dim(p["dec_wih"], H, Hp)                      # (E, 4Hp)
    dec_whh = _pad_gate_dim(_pad_to(p["dec_whh"], 0, Hp), H, Hp)      # (Hp, 4Hp)
    dec_b = _pad_gate_dim(p["dec_b"], H, Hp)                          # (1, 4Hp)

    wc_h = _pad_to(_pad_to(p["dec_wc"][:H], 0, Hp), 1, Hp)            # (Hp, Hp)
    wc_c = _pad_to(_pad_to(p["dec_wc"][H:], 0, Hp), 1, Hp)            # (Hp, Hp)
    dec_wc = jnp.concatenate([wc_h, wc_c], axis=0)                    # (2Hp, Hp)

    sf = p["ss_w"].shape[1]
    _, sfp = _ss_tiles(sf)
    ss_w = _pad_to(_pad_to(p["ss_w"], 0, Hp), 1, sfp)                 # (Hp, SFp)
    ss_b = _pad_to(p["ss_b"], 1, sfp)                                 # (1, SFp)

    # emb_table[id] @ W_ih + b == (emb_table @ W_ih + b)[id]  (exact fold).
    dec_gate_table = run_linear(p["emb_table"], dec_wih, dec_b)       # (V, 4Hp)

    return dict(enc_wih=enc_wih, enc_whh=enc_whh, enc_b=enc_b,
                dec_gate_table=dec_gate_table, dec_whh=dec_whh,
                dec_wc=dec_wc, ss_w=ss_w, ss_b=ss_b)


# ----------------------------------------------------------------------------
# Full forward pass (config.global_emb == False, config.hidden_mix == False).
# ----------------------------------------------------------------------------
@functools.partial(jax.jit, static_argnames=("hidden_size",))
def seq2seq_forward(params, src, src_len, tgt, tgt_len, *, hidden_size):
    S, B, F = src.shape
    H = hidden_size
    Hp = params["enc_whh"].shape[0]
    Bp = _round_up(B, SUBLANE)
    chunk = min(ENC_CHUNK, _round_up(S, SUBLANE))
    Sp = _round_up(S, chunk)

    # The PyTorch code sorts src_len only to feed pack_padded_sequence (and
    # does not reorder src); we use the per-sample lengths directly to gate
    # the recurrence and mask attention (equivalent for full-length batches).
    lens = src_len[0].astype(jnp.int32)                       # (B,)
    lens_p = _pad_to(lens, 0, Bp).reshape(Bp, 1)              # pad rows: len 0

    # Pad batch to a full 8-sublane tile and time to a chunk multiple so every
    # store in the recurrent kernels is unmasked and MXU rows are occupied.
    src_p = jnp.pad(src, ((0, Sp - S), (0, Bp - B), (0, 0)))

    # ---- encoder (time-chunked, fused input projection) --------------------
    contexts_sbh, h_n, c_n = run_encoder(
        src_p, lens_p, params["enc_wih"], params["enc_b"], params["enc_whh"],
        chunk=chunk)

    # One HBM-level relayout into the decoder's consumer layout (B, S, H); the
    # decoder then holds a single copy of the contexts in VMEM (no in-kernel
    # swapaxes duplicate / XLU transpose).
    # TODO(synk): emit (B, S, H) directly from the encoder via sublane-strided
    # context stores to drop this pass entirely.
    contexts = jnp.swapaxes(contexts_sbh, 0, 1)               # (Bp, Sp, Hp)

    # Additive attention mask from the true lengths (padded frames -> -1e30).
    amask = jnp.where(jnp.arange(Sp, dtype=jnp.int32)[None, :] < lens_p,
                      0.0, -1e30).astype(jnp.float32)         # (Bp, Sp)

    # ---- decoder over tgt[:-1] ----------------------------------------------
    tgt_in = tgt[:-1]                                         # (T-1, B) int
    gx_dec = params["dec_gate_table"][tgt_in]                 # (T-1, B, 4Hp)
    # TODO(synk): this tiny row gather stays in XLA; could move in-kernel via
    # PrefetchScalarGridSpec + pl.Element row blocks.
    gx_dec = jnp.pad(gx_dec, ((0, 0), (0, Bp - B), (0, 0)))

    outputs_p = run_decoder(gx_dec, contexts, amask, params["dec_whh"],
                            params["dec_wc"], h_n, c_n)       # (T-1, Bp, Hp)

    # ---- ss_model(src, outputs[:-1, :], tgt[1:-1]) --------------------------
    ss_in = outputs_p[:-1, :B, :]                             # (T-2, B, Hp)
    Tm2 = ss_in.shape[0]
    maps_flat = run_ss(ss_in.reshape(Tm2 * B, Hp), params["ss_w"],
                       params["ss_b"])
    predicted_maps = maps_flat[:, :S * F].reshape(Tm2, B, S, F)

    outputs = outputs_p[:, :B, :H]                            # drop padding
    return outputs, tgt[1:], predicted_maps


if __name__ == "__main__":
    # small shapes consistent with the module's forward()
    B = 2        # batch
    S = 8        # mix_speech_len (src time steps)
    F = 16       # input_emb_size / speech_fre
    H = 32       # rnn hidden size
    E = 32       # decoder embedding size
    V = 10       # tgt_vocab_size (number of speaker labels)
    T = 5        # tgt length (includes BOS/EOS)

    key = jax.random.PRNGKey(0)
    k_par, k_src, k_tgt = jax.random.split(key, 3)

    raw_params = init_params(k_par, F, H, E, V, S)
    params = prepare_params(raw_params, H)

    src = jax.random.normal(k_src, (S, B, F), jnp.float32)
    src_len = jnp.full((1, B), S, dtype=jnp.int32)
    tgt = jax.random.randint(k_tgt, (T, B), 0, V, dtype=jnp.int32)
    tgt_len = jnp.full((1, B), T, dtype=jnp.int32)

    outputs, tgt_shift, predicted_maps = seq2seq_forward(
        params, src, src_len, tgt, tgt_len, hidden_size=H)
    jax.block_until_ready((outputs, tgt_shift, predicted_maps))

    assert outputs.shape == (T - 1, B, H)
    assert tgt_shift.shape == (T - 1, B)
    assert predicted_maps.shape == (T - 2, B, S, F)
    print("KERNEL_OK")
</pallas_src>

<mosaic_0001>
module attributes {stable_mosaic.version = 11 : i64} {
  func.func @_linear_kernel(%arg0: i32, %arg1: memref<16x32xf32, #tpu.memory_space<vmem>>, %arg2: memref<32x512xf32, #tpu.memory_space<vmem>>, %arg3: memref<1x512xf32, #tpu.memory_space<vmem>>, %arg4: memref<16x512xf32, #tpu.memory_space<vmem>>) attributes {dimension_semantics = [#tpu.dimension_semantics<parallel>], iteration_bounds = array<i64: 1>, scalar_prefetch = 0 : i64, scratch_operands = 0 : i64, tpu.core_type = #tpu.core_type<tc>, window_params = [{transform_indices = @transform_0, window_bounds = array<i64: 16, 32>}, {pipeline_mode = #tpu.pipeline_mode<synchronous>, transform_indices = @transform_1, window_bounds = array<i64: 32, 512>}, {pipeline_mode = #tpu.pipeline_mode<synchronous>, transform_indices = @transform_2, window_bounds = array<i64: 1, 512>}, {transform_indices = @transform_3, window_bounds = array<i64: 16, 512>}]} {
    %c0 = arith.constant 0 : index
    %c0_0 = arith.constant 0 : index
    %0 = vector.load %arg1[%c0, %c0_0] : memref<16x32xf32, #tpu.memory_space<vmem>>, vector<16x32xf32>
    %c0_1 = arith.constant 0 : index
    %c0_2 = arith.constant 0 : index
    %1 = vector.load %arg2[%c0_1, %c0_2] : memref<32x512xf32, #tpu.memory_space<vmem>>, vector<32x512xf32>
    %cst = arith.constant dense<0.000000e+00> : vector<16x512xf32>
    %2 = tpu.matmul %0, %1, %cst {dimension_numbers = #tpu.dot_dimension_numbers<[1], [0], [0], [1], [0, 0, 1, 1], [], []>} : vector<16x32xf32>, vector<32x512xf32>, vector<16x512xf32> -> vector<16x512xf32>
    %c0_3 = arith.constant 0 : index
    %c0_4 = arith.constant 0 : index
    %3 = vector.load %arg3[%c0_3, %c0_4] : memref<1x512xf32, #tpu.memory_space<vmem>>, vector<1x512xf32>
    %4 = vector.broadcast %3 : vector<1x512xf32> to vector<16x512xf32>
    %5 = arith.addf %2, %4 : vector<16x512xf32>
    %c0_5 = arith.constant 0 : index
    %c0_6 = arith.constant 0 : index
    %6 = vector.load %arg4[%c0_5, %c0_6] : memref<16x512xf32, #tpu.memory_space<vmem>>, vector<16x512xf32>
    tpu.vector_store %arg4[%c0_5, %c0_6], %5 {strides = array<i32>} : memref<16x512xf32, #tpu.memory_space<vmem>>, vector<16x512xf32>,
    return
  }
  func.func @transform_0(%arg0: i32) -> (i32, i32) {
    %c0_i32 = arith.constant 0 : i32
    %c0_i32_0 = arith.constant 0 : i32
    return %arg0, %c0_i32 : i32, i32
  }
  func.func @transform_1(%arg0: i32) -> (i32, i32) {
    %c0_i32 = arith.constant 0 : i32
    %c0_i32_0 = arith.constant 0 : i32
    %c0_i32_1 = arith.constant 0 : i32
    return %c0_i32, %c0_i32_0 : i32, i32
  }
  func.func @transform_2(%arg0: i32) -> (i32, i32) {
    %c0_i32 = arith.constant 0 : i32
    %c0_i32_0 = arith.constant 0 : i32
    %c0_i32_1 = arith.constant 0 : i32
    return %c0_i32, %c0_i32_0 : i32, i32
  }
  func.func @transform_3(%arg0: i32) -> (i32, i32) {
    %c0_i32 = arith.constant 0 : i32
    %c0_i32_0 = arith.constant 0 : i32
    return %arg0, %c0_i32 : i32, i32
  }
}

</mosaic_0001>

<llo_original>
// kernel: tpu_custom_call.1
$region0: #{tpu_custom_call.1}
  #allocation0 [shape = 'u32[]', space=smem, size = 0x4, offset = 0x4, fixed_abs, tag = 'smem constant byte address 0x4 - core index']
  #allocation1 [shape = 'u32[144,128]{1,0:T(1,128)}', space=vmem, size = 0x12000, scoped, tag = 'internal scratch']
  %s0 = inlined_call_operand.hbm [shape: f32[16,32], index: 0, kind: input, shape index: {}]
  %s1 = inlined_call_operand.hbm [shape: f32[32,512], index: 1, kind: input, shape index: {}]
  %s2 = inlined_call_operand.vmem [shape: f32[1,512], index: 2, kind: input, shape index: {}]
  %s3 = inlined_call_operand.hbm [shape: f32[16,512], index: 3, kind: output, shape index: {}]
  %s4 = sld [smem:[#allocation0]]
  $region30: #{tpu_custom_call.1} parent=0
    _
  %s6 = ssub.s32 1, %s4
  %s7 = scalar_select 0, %s6, %s4
  $region1: #{tpu_custom_call.1} parent=0
    #allocation2 [shape = 'u8[8192]{0}', space=vmem, size = 0x2000, scoped, tag = 'input window, operand 0, single buffered']
    #allocation3 [shape = 's32[1]{0}', space=sflag, size = 0x4, scoped, tag = 'scoped memory for tpu_custom_call.1']
    #allocation4 [shape = 's32[1]{0}', space=sflag, size = 0x4, scoped, tag = 'scoped memory for tpu_custom_call.1']
    #allocation5 [shape = 'u8[65536]{0}', space=vmem, size = 0x10000, scoped, tag = 'input window, operand 1, single buffered']
    #allocation6 [shape = 's32[1]{0}', space=sflag, size = 0x4, scoped, tag = 'scoped memory for tpu_custom_call.1']
    #allocation7 [shape = 'u8[32768]{0}', space=vmem, size = 0x8000, scoped, tag = 'output window, operand 0, single buffered']
    %8 = vsyncpa [#allocation3], 0
    %9 = vsyncpa [#allocation6], 0
    %10 = vsyncpa [#allocation4], 0
    // Predicated region
    $region2: #{tpu_custom_call.1} parent=1 // pred_check
      _
    $region3: #{tpu_custom_call.1} parent=1 // pred_check_branch
      %12 = sbr.rel (0) target = $region5
    $region4: #{tpu_custom_call.1} parent=1 // pred_region
      %s14 = ssub.s32 256, 256
      %15 = vsyncadd [#allocation3], %s14
      %s16 = sshll.u32 [#allocation2], 4
      %s17 = int_to_ptr.vmem [resolvable:$true] %s16
      %22 = dma.hbm_to_vmem [thread:$0]  %s0, 256, %s17, [#allocation3], 128, 128, 8
    $region5: #{tpu_custom_call.1} parent=1 // pred_fallthru
      _
    // Predicated region
    $region6: #{tpu_custom_call.1} parent=1 // pred_check
      _
    $region7: #{tpu_custom_call.1} parent=1 // pred_check_branch
      %24 = sbr.rel (0) target = $region9
    $region8: #{tpu_custom_call.1} parent=1 // pred_region
      %s26 = ssub.s32 2048, 2048
      %27 = vsyncadd [#allocation6], %s26
      %s28 = sshll.u32 [#allocation5], 4
      %s29 = int_to_ptr.vmem [resolvable:$true] %s28
      %34 = dma.hbm_to_vmem [thread:$0]  %s1, 2048, %s29, [#allocation6], 512, 512, 32
    $region9: #{tpu_custom_call.1} parent=1 // pred_fallthru
      _
    // Predicated region
    $region10: #{tpu_custom_call.1} parent=1 // pred_check
      _
    $region11: #{tpu_custom_call.1} parent=1 // pred_check_branch
      %36 = sbr.rel (0) target = $region13
    $region12: #{tpu_custom_call.1} parent=1 // pred_region
      _
    $region13: #{tpu_custom_call.1} parent=1 // pred_fallthru
      _
    // Predicated region
    $region14: #{tpu_custom_call.1} parent=1 // pred_check
      _
    $region15: #{tpu_custom_call.1} parent=1 // pred_check_branch
      %38 = sbr.rel (0) target = $region17
    $region16: #{tpu_custom_call.1} parent=1 // pred_region
      %39 = dma.done [#allocation3], 256
    $region17: #{tpu_custom_call.1} parent=1 // pred_fallthru
      _
    // Predicated region
    $region18: #{tpu_custom_call.1} parent=1 // pred_check
      _
    $region19: #{tpu_custom_call.1} parent=1 // pred_check_branch
      %41 = sbr.rel (0) target = $region21
    $region20: #{tpu_custom_call.1} parent=1 // pred_region
      %42 = dma.done [#allocation6], 2048
    $region21: #{tpu_custom_call.1} parent=1 // pred_fallthru
      _
    %v43 = vld [vmem:[#allocation2] sm:$0xff]
    %v44 = vld [vmem:[#allocation2 + $0x8] sm:$0xff]
    %v45 = vld [vmem:[#allocation5] sm:$0xff]
    %v46 = vld [vmem:[#allocation5 + $0x8] sm:$0xff]
    %v47 = vld [vmem:[#allocation5 + $0x10] sm:$0xff]
    %v48 = vld [vmem:[#allocation5 + $0x18] sm:$0xff]
    %v49 = vld [vmem:[#allocation5 + $0x20] sm:$0xff]
    %v50 = vld [vmem:[#allocation5 + $0x28] sm:$0xff]
    %v51 = vld [vmem:[#allocation5 + $0x30] sm:$0xff]
    %v52 = vld [vmem:[#allocation5 + $0x38] sm:$0xff]
    %v53 = vld [vmem:[#allocation5 + $0x40] sm:$0xff]
    %v54 = vld [vmem:[#allocation5 + $0x48] sm:$0xff]
    %v55 = vld [vmem:[#allocation5 + $0x50] sm:$0xff]
    %v56 = vld [vmem:[#allocation5 + $0x58] sm:$0xff]
    %v57 = vld [vmem:[#allocation5 + $0x60] sm:$0xff]
    %v58 = vld [vmem:[#allocation5 + $0x68] sm:$0xff]
    %v59 = vld [vmem:[#allocation5 + $0x70] sm:$0xff]
    %v60 = vld [vmem:[#allocation5 + $0x78] sm:$0xff]
    %v61 = vld [vmem:[%s2] sm:$0xf]
    %v63 = vlaneseq
    %v64 = vshrl.u32 %v63, 7
    %v65 = vsub.s32 0, %v64
    %v66 = vrot.slane %v61, %v65
    %v67 = vlaneseq
    %v68 = vshrl.u32 %v67, 7
    %v69 = vsub.s32 1, %v68
    %v70 = vrot.slane %v61, %v69
    %v71 = vlaneseq
    %v72 = vshrl.u32 %v71, 7
    %v73 = vsub.s32 2, %v72
    %v74 = vrot.slane %v61, %v73
    %v75 = vlaneseq
    %v76 = vshrl.u32 %v75, 7
    %v77 = vsub.s32 3, %v76
    %v78 = vrot.slane %v61, %v77
    %vm83 = vcmask 261120
    %v85 = vsel %vm83, %v43, 0
    %v88 = vsel %vm83, %v44, 0
    %90 = vmatprep.subr.mxu0 %v46
    %91 = vmatpush1.msra.mxu0 %v45
    %92 = vmatprep.subr.mxu0 %v50
    %93 = vmatpush1.msra.mxu0 %v49
    %94 = vmatprep.subr.mxu0 %v54
    %95 = vmatpush1.msra.mxu0 %v53
    %96 = vmatprep.subr.mxu0 %v58
    %97 = vmatpush1.msra.mxu0 %v57
    %98 = vmatprep.subr.mxu0 0.0
    %99 = vmatpush1.msra.mxu0 0.0
    %100 = vmatprep.subr.mxu0 0.0
    %101 = vmatpush1.msra.mxu0 0.0
    %102 = vmatprep.subr.mxu0 0.0
    %103 = vmatpush1.msra.mxu0 0.0
    %104 = vmatprep.subr.mxu0 0.0
    %105 = vmatpush1.msra.mxu0 0.0
    %106 = vmatprep.subr.mxu0 0.0
    %107 = vmatpush1.msra.mxu0 0.0
    %108 = vmatprep.subr.mxu0 0.0
    %109 = vmatpush1.msra.mxu0 0.0
    %110 = vmatprep.subr.mxu0 0.0
    %111 = vmatpush1.msra.mxu0 0.0
    %112 = vmatprep.subr.mxu0 0.0
    %113 = vmatpush1.msra.mxu0 0.0
    %114 = vmatprep.subr.mxu0 0.0
    %115 = vmatpush1.msra.mxu0 0.0
    %116 = vmatprep.subr.mxu0 0.0
    %117 = vmatpush1.msra.mxu0 0.0
    %118 = vmatprep.subr.mxu0 0.0
    %119 = vmatpush1.msra.mxu0 0.0
    %120 = vmatprep.subr.mxu0 0.0
    %121 = vmatpush1.msra.mxu0 0.0
    %122 = vmatprep.subr.mxu0 0.0
    %123 = vmatpush1.msra.mxu0 0.0
    %124 = vmatprep.subr.mxu0 0.0
    %125 = vmatpush1.msra.mxu0 0.0
    %126 = vmatprep.subr.mxu0 0.0
    %127 = vmatpush1.msra.mxu0 0.0
    %128 = vmatprep.subr.mxu0 0.0
    %129 = vmatpush1.msra.mxu0 0.0
    %130 = vmatprep.subr.mxu0 0.0
    %131 = vmatpush1.msra.mxu0 0.0
    %132 = vmatprep.subr.mxu0 0.0
    %133 = vmatpush1.msra.mxu0 0.0
    %134 = vmatprep.subr.mxu0 0.0
    %135 = vmatpush1.msra.mxu0 0.0
    %136 = vmatprep.subr.mxu0 0.0
    %137 = vmatpush1.msra.mxu0 0.0
    %138 = vmatprep.subr.mxu0 0.0
    %139 = vmatpush1.msra.mxu0 0.0
    %140 = vmatprep.subr.mxu0 0.0
    %141 = vmatpush1.msra.mxu0 0.0
    %142 = vmatprep.subr.mxu0 0.0
    %143 = vmatpush1.msra.mxu0 0.0
    %144 = vmatprep.subr.mxu0 0.0
    %145 = vmatpush1.msra.mxu0 0.0
    %146 = vmatprep.subr.mxu0 0.0
    %147 = vmatpush1.msra.mxu0 0.0
    %148 = vmatprep.subr.mxu0 0.0
    %149 = vmatpush1.msra.mxu0 0.0
    %150 = vmatprep.subr.mxu0 0.0
    %151 = vmatpush1.msra.mxu0 0.0
    %152 = vmatprep.subr.mxu0 0.0
    %153 = vmatpush1.msra.mxu0 0.0
    %154 = vmatprep.mubr.f32.mxu0 0.0
    %155 = vmatmul.mubr.f32.gmra.mrb[0].mxu0 %v85
    %v156 = vpop.f32.mrb[0].mxu0
    %v157 = vadd.f32 %v66, %v156
    %v158 = vpop.f32.mrb[0].mxu0
    %v159 = vadd.f32 %v70, %v158
    %160 = vmatprep.mubr.f32.mxu0 0.0
    %161 = vmatmul.mubr.f32.gmra.mrb[0].mxu0 %v88
    %v162 = vpop.f32.mrb[0].mxu0
    %v163 = vadd.f32 %v66, %v162
    %v164 = vpop.f32.mrb[0].mxu0
    %v165 = vadd.f32 %v70, %v164
    %166 = vdwg.mxu0
    %167 = vmatprep.subr.mxu0 %v48
    %168 = vmatpush1.msra.mxu0 %v47
    %169 = vmatprep.subr.mxu0 %v52
    %170 = vmatpush1.msra.mxu0 %v51
    %171 = vmatprep.subr.mxu0 %v56
    %172 = vmatpush1.msra.mxu0 %v55
    %173 = vmatprep.subr.mxu0 %v60
    %174 = vmatpush1.msra.mxu0 %v59
    %175 = vmatprep.subr.mxu0 0.0
    %176 = vmatpush1.msra.mxu0 0.0
    %177 = vmatprep.subr.mxu0 0.0
    %178 = vmatpush1.msra.mxu0 0.0
    %179 = vmatprep.subr.mxu0 0.0
    %180 = vmatpush1.msra.mxu0 0.0
    %181 = vmatprep.subr.mxu0 0.0
    %182 = vmatpush1.msra.mxu0 0.0
    %183 = vmatprep.subr.mxu0 0.0
    %184 = vmatpush1.msra.mxu0 0.0
    %185 = vmatprep.subr.mxu0 0.0
    %186 = vmatpush1.msra.mxu0 0.0
    %187 = vmatprep.subr.mxu0 0.0
    %188 = vmatpush1.msra.mxu0 0.0
    %189 = vmatprep.subr.mxu0 0.0
    %190 = vmatpush1.msra.mxu0 0.0
    %191 = vmatprep.subr.mxu0 0.0
    %192 = vmatpush1.msra.mxu0 0.0
    %193 = vmatprep.subr.mxu0 0.0
    %194 = vmatpush1.msra.mxu0 0.0
    %195 = vmatprep.subr.mxu0 0.0
    %196 = vmatpush1.msra.mxu0 0.0
    %197 = vmatprep.subr.mxu0 0.0
    %198 = vmatpush1.msra.mxu0 0.0
    %199 = vmatprep.subr.mxu0 0.0
    %200 = vmatpush1.msra.mxu0 0.0
    %201 = vmatprep.subr.mxu0 0.0
    %202 = vmatpush1.msra.mxu0 0.0
    %203 = vmatprep.subr.mxu0 0.0
    %204 = vmatpush1.msra.mxu0 0.0
    %205 = vmatprep.subr.mxu0 0.0
    %206 = vmatpush1.msra.mxu0 0.0
    %207 = vmatprep.subr.mxu0 0.0
    %208 = vmatpush1.msra.mxu0 0.0
    %209 = vmatprep.subr.mxu0 0.0
    %210 = vmatpush1.msra.mxu0 0.0
    %211 = vmatprep.subr.mxu0 0.0
    %212 = vmatpush1.msra.mxu0 0.0
    %213 = vmatprep.subr.mxu0 0.0
    %214 = vmatpush1.msra.mxu0 0.0
    %215 = vmatprep.subr.mxu0 0.0
    %216 = vmatpush1.msra.mxu0 0.0
    %217 = vmatprep.subr.mxu0 0.0
    %218 = vmatpush1.msra.mxu0 0.0
    %219 = vmatprep.subr.mxu0 0.0
    %220 = vmatpush1.msra.mxu0 0.0
    %221 = vmatprep.subr.mxu0 0.0
    %222 = vmatpush1.msra.mxu0 0.0
    %223 = vmatprep.subr.mxu0 0.0
    %224 = vmatpush1.msra.mxu0 0.0
    %225 = vmatprep.subr.mxu0 0.0
    %226 = vmatpush1.msra.mxu0 0.0
    %227 = vmatprep.subr.mxu0 0.0
    %228 = vmatpush1.msra.mxu0 0.0
    %229 = vmatprep.subr.mxu0 0.0
    %230 = vmatpush1.msra.mxu0 0.0
    %231 = vmatprep.mubr.f32.mxu0 0.0
    %232 = vmatmul.mubr.f32.gmra.mrb[0].mxu0 %v85
    %v233 = vpop.f32.mrb[0].mxu0
    %v234 = vadd.f32 %v74, %v233
    %v235 = vpop.f32.mrb[0].mxu0
    %v236 = vadd.f32 %v78, %v235
    %237 = vmatprep.mubr.f32.mxu0 0.0
    %238 = vmatmul.mubr.f32.gmra.mrb[0].mxu0 %v88
    %v239 = vpop.f32.mrb[0].mxu0
    %v240 = vadd.f32 %v74, %v239
    %v241 = vpop.f32.mrb[0].mxu0
    %v242 = vadd.f32 %v78, %v241
    %243 = vdwg.mxu0
    %244 = vst [vmem:[#allocation7] sm:$0xff] %v157
    %245 = vst [vmem:[#allocation7 + $0x8] sm:$0xff] %v159
    %246 = vst [vmem:[#allocation7 + $0x10] sm:$0xff] %v234
    %247 = vst [vmem:[#allocation7 + $0x18] sm:$0xff] %v236
    %248 = vst [vmem:[#allocation7 + $0x20] sm:$0xff] %v163
    %249 = vst [vmem:[#allocation7 + $0x28] sm:$0xff] %v165
    %250 = vst [vmem:[#allocation7 + $0x30] sm:$0xff] %v240
    %251 = vst [vmem:[#allocation7 + $0x38] sm:$0xff] %v242
    // Predicated region
    $region22: #{tpu_custom_call.1} parent=1 // pred_check
      _
    $region23: #{tpu_custom_call.1} parent=1 // pred_check_branch
      %253 = sbr.rel (0) target = $region25
    $region24: #{tpu_custom_call.1} parent=1 // pred_region
      %s255 = ssub.s32 1024, 1024
      %256 = vsyncadd [#allocation4], %s255
      %s257 = sshll.u32 [#allocation7], 4
      %s258 = int_to_ptr.vmem [resolvable:$true] %s257
      %263 = dma.vmem_to_hbm [thread:$0]  %s258, 1024, %s3, [#allocation4], 512, 512, 32
    $region25: #{tpu_custom_call.1} parent=1 // pred_fallthru
      _
    // Predicated region
    $region26: #{tpu_custom_call.1} parent=1 // pred_check
      _
    $region27: #{tpu_custom_call.1} parent=1 // pred_check_branch
      %265 = sbr.rel (0) target = $region29
    $region28: #{tpu_custom_call.1} parent=1 // pred_region
      %266 = dma.done [#allocation4], 1024
    $region29: #{tpu_custom_call.1} parent=1 // pred_fallthru
      _
    %267 = vsyncpa [#allocation3], 1
    %268 = vsyncpa [#allocation6], 1
    %269 = vsyncpa [#allocation4], 1

</llo_original>
